<compile_context>
chip_gen: v7x
topology: tpu7x:2x2x1
jax: 0.10.0
libtpu: 0.0.40
codegen_flags: <defaults>
</compile_context>

<pallas_src>
import numpy as np
import jax
import jax.numpy as jnp
from jax.experimental import pallas as pl
from jax.experimental.pallas import tpu as pltpu

KH, KW = 4, 4      # conv kernel size
OC = 4             # output channels
POOL = 4           # pool size / stride


def _make_weights():
    """Deterministic weights, exactly as in the PyTorch script (OIHW)."""
    filter_vals = np.array([[-1, -1, 1, 1],
                            [-1, -1, 1, 1],
                            [-1, -1, 1, 1],
                            [-1, -1, 1, 1]], dtype=np.float32)
    filter_1 = filter_vals
    filter_2 = -filter_1
    filter_3 = filter_1.T
    filter_4 = -filter_3
    filters = np.stack([filter_1, filter_2, filter_3, filter_4])      # (4, 4, 4)
    return jnp.asarray(filters[:, None, :, :].astype(np.float32))     # (4, 1, 4, 4)


def _net_kernel(x_ref, conv_ref, relu_ref, pool_ref):
    # x_ref:    (B, 1, H, W)    VMEM
    # conv_ref: (B, OC, Ho, Wo) VMEM
    # relu_ref: (B, OC, Ho, Wo) VMEM
    # pool_ref: (B, OC, Hp, Wp) VMEM
    B = x_ref.shape[0]
    H, W = x_ref.shape[2], x_ref.shape[3]
    Ho, Wo = H - (KH - 1), W - (KW - 1)
    Hp, Wp = Ho // POOL, Wo // POOL

    x = x_ref[...][:, 0]                                         # (B, H, W)

    # Separable +/-1 conv: running sums along each axis, batched over B.
    v = (x[:, 0:Ho, :] + x[:, 1:Ho + 1, :]
         + x[:, 2:Ho + 2, :] + x[:, 3:Ho + 3, :])                 # (B, Ho, W)
    hs = (x[:, :, 0:Wo] + x[:, :, 1:Wo + 1]
          + x[:, :, 2:Wo + 2] + x[:, :, 3:Wo + 3])                # (B, H, Wo)

    # filter_1: horizontal pattern [-1,-1,+1,+1] applied to the 4-row sum.
    c0 = ((v[:, :, 2:Wo + 2] + v[:, :, 3:Wo + 3])
          - (v[:, :, 0:Wo] + v[:, :, 1:Wo + 1]))                  # (B, Ho, Wo)
    # filter_3 (= filter_1.T): vertical pattern applied to the 4-col sum.
    c2 = ((hs[:, 2:Ho + 2, :] + hs[:, 3:Ho + 3, :])
          - (hs[:, 0:Ho, :] + hs[:, 1:Ho + 1, :]))                # (B, Ho, Wo)

    # filter_2 = -filter_1, filter_4 = -filter_3.
    for oc, c in enumerate((c0, -c0, c2, -c2)):
        conv_ref[:, oc:oc + 1] = c[:, None]
        r = jnp.maximum(c, 0.0)
        relu_ref[:, oc:oc + 1] = r[:, None]

        # MaxPool2d(4, 4), floor mode: crop ragged edge, reduce H first
        # (sublane split only), then W (lane split on the 4x-smaller tensor).
        rc = r[:, :Hp * POOL, :Wp * POOL]                         # (B, Hp*4, Wp*4)
        h_red = rc.reshape(B, Hp, POOL, Wp * POOL).max(axis=2)    # (B, Hp, Wp*4)
        pooled = h_red.reshape(B, Hp, Wp, POOL).max(axis=3)       # (B, Hp, Wp)
        pool_ref[:, oc:oc + 1] = pooled[:, None]


def net_forward(x, weight=None):
    """x: (N, 1, H, W) f32 -> (conv_x, activated_x, pooled_x).

    The conv weights are baked into the kernel as compile-time constants
    (the fixed +/-1 edge-detector filters of the PyTorch module). If `weight`
    is given it is validated against those constants.
    """
    N, C, H, W = x.shape
    assert C == 1, "Net expects a single input channel"
    Ho, Wo = H - (KH - 1), W - (KW - 1)
    Hp, Wp = Ho // POOL, Wo // POOL

    if weight is not None:
        if not np.array_equal(np.asarray(weight), np.asarray(_make_weights())):
            raise ValueError("net_forward is specialized to the fixed edge-detector "
                             "weights of the PyTorch module; got different weights.")

    # Batch elements per grid step: biggest tile whose (input + 2 conv-sized
    # outputs + pool) working set stays within a conservative VMEM budget,
    # leaving room for 2-deep double buffering under v5e's 16 MiB default.
    bytes_per_image = 4 * (H * W + 2 * OC * Ho * Wo + OC * Hp * Wp)
    budget = 4 << 20
    b_tile = max(1, min(N, budget // max(bytes_per_image, 1)))
    while N % b_tile != 0:
        b_tile -= 1
    grid = (N // b_tile,)

    out_shapes = (
        jax.ShapeDtypeStruct((N, OC, Ho, Wo), jnp.float32),
        jax.ShapeDtypeStruct((N, OC, Ho, Wo), jnp.float32),
        jax.ShapeDtypeStruct((N, OC, Hp, Wp), jnp.float32),
    )

    return pl.pallas_call(
        _net_kernel,
        out_shape=out_shapes,
        grid=grid,
        in_specs=[
            pl.BlockSpec((b_tile, 1, H, W), lambda i: (i, 0, 0, 0)),
        ],
        out_specs=(
            pl.BlockSpec((b_tile, OC, Ho, Wo), lambda i: (i, 0, 0, 0)),
            pl.BlockSpec((b_tile, OC, Ho, Wo), lambda i: (i, 0, 0, 0)),
            pl.BlockSpec((b_tile, OC, Hp, Wp), lambda i: (i, 0, 0, 0)),
        ),
        compiler_params=pltpu.CompilerParams(
            dimension_semantics=("parallel",)),
    )(x)


def _reference(x, weight):
    """Pure-JAX reference matching PyTorch semantics."""
    conv = jax.lax.conv_general_dilated(
        x, weight, window_strides=(1, 1), padding="VALID",
        dimension_numbers=("NCHW", "OIHW", "NCHW"))
    relu = jnp.maximum(conv, 0.0)
    N, C, Ho, Wo = relu.shape
    Hp, Wp = Ho // POOL, Wo // POOL
    cropped = relu[:, :, :Hp * POOL, :Wp * POOL]
    pooled = cropped.reshape(N, C, Hp, POOL, Wp, POOL).max(axis=(3, 5))
    return conv, relu, pooled


if __name__ == "__main__":
    key = jax.random.PRNGKey(0)
    x = jax.random.normal(key, (2, 1, 16, 16), dtype=jnp.float32)
    weight = _make_weights()  # (4, 1, 4, 4)

    conv_x, activated_x, pooled_x = net_forward(x, weight)
    jax.block_until_ready((conv_x, activated_x, pooled_x))

    ref_conv, ref_relu, ref_pool = _reference(x, weight)
    np.testing.assert_allclose(np.asarray(conv_x), np.asarray(ref_conv), atol=1e-4, rtol=1e-4)
    np.testing.assert_allclose(np.asarray(activated_x), np.asarray(ref_relu), atol=1e-4, rtol=1e-4)
    np.testing.assert_allclose(np.asarray(pooled_x), np.asarray(ref_pool), atol=1e-4, rtol=1e-4)

    print("KERNEL_OK")
</pallas_src>

<mosaic_0001>
module attributes {stable_mosaic.version = 11 : i64} {
  func.func @_net_kernel(%arg0: i32, %arg1: memref<2x1x16x16xf32, #tpu.memory_space<vmem>>, %arg2: memref<2x4x13x13xf32, #tpu.memory_space<vmem>>, %arg3: memref<2x4x13x13xf32, #tpu.memory_space<vmem>>, %arg4: memref<2x4x3x3xf32, #tpu.memory_space<vmem>>) attributes {dimension_semantics = [#tpu.dimension_semantics<parallel>], iteration_bounds = array<i64: 1>, scalar_prefetch = 0 : i64, scratch_operands = 0 : i64, tpu.core_type = #tpu.core_type<tc>, window_params = [{transform_indices = @transform_0, window_bounds = array<i64: 2, 1, 16, 16>}, {transform_indices = @transform_1, window_bounds = array<i64: 2, 4, 13, 13>}, {transform_indices = @transform_2, window_bounds = array<i64: 2, 4, 13, 13>}, {transform_indices = @transform_3, window_bounds = array<i64: 2, 4, 3, 3>}]} {
    %c0 = arith.constant 0 : index
    %c0_0 = arith.constant 0 : index
    %c0_1 = arith.constant 0 : index
    %c0_2 = arith.constant 0 : index
    %0 = vector.load %arg1[%c0, %c0_0, %c0_1, %c0_2] : memref<2x1x16x16xf32, #tpu.memory_space<vmem>>, vector<2x1x16x16xf32>
    %1 = vector.shape_cast %0 : vector<2x1x16x16xf32> to vector<2x16x16xf32>
    %2 = vector.extract_strided_slice %1 {offsets = [0, 0, 0], sizes = [2, 13, 16], strides = [1, 1, 1]} : vector<2x16x16xf32> to vector<2x13x16xf32>
    %3 = vector.extract_strided_slice %1 {offsets = [0, 1, 0], sizes = [2, 13, 16], strides = [1, 1, 1]} : vector<2x16x16xf32> to vector<2x13x16xf32>
    %4 = arith.addf %2, %3 : vector<2x13x16xf32>
    %5 = vector.extract_strided_slice %1 {offsets = [0, 2, 0], sizes = [2, 13, 16], strides = [1, 1, 1]} : vector<2x16x16xf32> to vector<2x13x16xf32>
    %6 = arith.addf %4, %5 : vector<2x13x16xf32>
    %7 = vector.extract_strided_slice %1 {offsets = [0, 3, 0], sizes = [2, 13, 16], strides = [1, 1, 1]} : vector<2x16x16xf32> to vector<2x13x16xf32>
    %8 = arith.addf %6, %7 : vector<2x13x16xf32>
    %9 = vector.extract_strided_slice %1 {offsets = [0, 0, 0], sizes = [2, 16, 13], strides = [1, 1, 1]} : vector<2x16x16xf32> to vector<2x16x13xf32>
    %10 = vector.extract_strided_slice %1 {offsets = [0, 0, 1], sizes = [2, 16, 13], strides = [1, 1, 1]} : vector<2x16x16xf32> to vector<2x16x13xf32>
    %11 = arith.addf %9, %10 : vector<2x16x13xf32>
    %12 = vector.extract_strided_slice %1 {offsets = [0, 0, 2], sizes = [2, 16, 13], strides = [1, 1, 1]} : vector<2x16x16xf32> to vector<2x16x13xf32>
    %13 = arith.addf %11, %12 : vector<2x16x13xf32>
    %14 = vector.extract_strided_slice %1 {offsets = [0, 0, 3], sizes = [2, 16, 13], strides = [1, 1, 1]} : vector<2x16x16xf32> to vector<2x16x13xf32>
    %15 = arith.addf %13, %14 : vector<2x16x13xf32>
    %16 = vector.extract_strided_slice %8 {offsets = [0, 0, 2], sizes = [2, 13, 13], strides = [1, 1, 1]} : vector<2x13x16xf32> to vector<2x13x13xf32>
    %17 = vector.extract_strided_slice %8 {offsets = [0, 0, 3], sizes = [2, 13, 13], strides = [1, 1, 1]} : vector<2x13x16xf32> to vector<2x13x13xf32>
    %18 = arith.addf %16, %17 : vector<2x13x13xf32>
    %19 = vector.extract_strided_slice %8 {offsets = [0, 0, 0], sizes = [2, 13, 13], strides = [1, 1, 1]} : vector<2x13x16xf32> to vector<2x13x13xf32>
    %20 = vector.extract_strided_slice %8 {offsets = [0, 0, 1], sizes = [2, 13, 13], strides = [1, 1, 1]} : vector<2x13x16xf32> to vector<2x13x13xf32>
    %21 = arith.addf %19, %20 : vector<2x13x13xf32>
    %22 = arith.subf %18, %21 : vector<2x13x13xf32>
    %23 = vector.extract_strided_slice %15 {offsets = [0, 2, 0], sizes = [2, 13, 13], strides = [1, 1, 1]} : vector<2x16x13xf32> to vector<2x13x13xf32>
    %24 = vector.extract_strided_slice %15 {offsets = [0, 3, 0], sizes = [2, 13, 13], strides = [1, 1, 1]} : vector<2x16x13xf32> to vector<2x13x13xf32>
    %25 = arith.addf %23, %24 : vector<2x13x13xf32>
    %26 = vector.extract_strided_slice %15 {offsets = [0, 0, 0], sizes = [2, 13, 13], strides = [1, 1, 1]} : vector<2x16x13xf32> to vector<2x13x13xf32>
    %27 = vector.extract_strided_slice %15 {offsets = [0, 1, 0], sizes = [2, 13, 13], strides = [1, 1, 1]} : vector<2x16x13xf32> to vector<2x13x13xf32>
    %28 = arith.addf %26, %27 : vector<2x13x13xf32>
    %29 = arith.subf %25, %28 : vector<2x13x13xf32>
    %cst = arith.constant 0.000000e+00 : f32
    %30 = vector.broadcast %cst : f32 to vector<2x13x13xf32>
    %31 = arith.subf %30, %22 : vector<2x13x13xf32>
    %cst_3 = arith.constant 0.000000e+00 : f32
    %32 = vector.broadcast %cst_3 : f32 to vector<2x13x13xf32>
    %33 = arith.subf %32, %29 : vector<2x13x13xf32>
    %34 = vector.shape_cast %22 : vector<2x13x13xf32> to vector<2x1x13x13xf32>
    %c0_4 = arith.constant 0 : index
    %c0_5 = arith.constant 0 : index
    %c0_6 = arith.constant 0 : index
    %c0_7 = arith.constant 0 : index
    %35 = vector.load %arg2[%c0_4, %c0_5, %c0_6, %c0_7] : memref<2x4x13x13xf32, #tpu.memory_space<vmem>>, vector<2x1x13x13xf32>
    tpu.vector_store %arg2[%c0_4, %c0_5, %c0_6, %c0_7], %34 {strides = array<i32>} : memref<2x4x13x13xf32, #tpu.memory_space<vmem>>, vector<2x1x13x13xf32>,
    %cst_8 = arith.constant 0.000000e+00 : f32
    %36 = vector.broadcast %cst_8 : f32 to vector<2x13x13xf32>
    %37 = arith.maximumf %22, %36 : vector<2x13x13xf32>
    %38 = vector.shape_cast %37 : vector<2x13x13xf32> to vector<2x1x13x13xf32>
    %c0_9 = arith.constant 0 : index
    %c0_10 = arith.constant 0 : index
    %c0_11 = arith.constant 0 : index
    %c0_12 = arith.constant 0 : index
    %39 = vector.load %arg3[%c0_9, %c0_10, %c0_11, %c0_12] : memref<2x4x13x13xf32, #tpu.memory_space<vmem>>, vector<2x1x13x13xf32>
    tpu.vector_store %arg3[%c0_9, %c0_10, %c0_11, %c0_12], %38 {strides = array<i32>} : memref<2x4x13x13xf32, #tpu.memory_space<vmem>>, vector<2x1x13x13xf32>,
    %40 = vector.extract_strided_slice %37 {offsets = [0, 0, 0], sizes = [2, 12, 12], strides = [1, 1, 1]} : vector<2x13x13xf32> to vector<2x12x12xf32>
    %41 = vector.shape_cast %40 : vector<2x12x12xf32> to vector<2x3x4x12xf32>
    %cst_13 = arith.constant dense<0xFF800000> : vector<2x3x12xf32>
    %42 = vector.multi_reduction <maximumf>, %41, %cst_13 [2] : vector<2x3x4x12xf32> to vector<2x3x12xf32>
    %43 = vector.shape_cast %42 : vector<2x3x12xf32> to vector<2x3x3x4xf32>
    %cst_14 = arith.constant dense<0xFF800000> : vector<2x3x3xf32>
    %44 = vector.multi_reduction <maximumf>, %43, %cst_14 [3] : vector<2x3x3x4xf32> to vector<2x3x3xf32>
    %45 = vector.shape_cast %44 : vector<2x3x3xf32> to vector<2x1x3x3xf32>
    %c0_15 = arith.constant 0 : index
    %c0_16 = arith.constant 0 : index
    %c0_17 = arith.constant 0 : index
    %c0_18 = arith.constant 0 : index
    %46 = vector.load %arg4[%c0_15, %c0_16, %c0_17, %c0_18] : memref<2x4x3x3xf32, #tpu.memory_space<vmem>>, vector<2x1x3x3xf32>
    tpu.vector_store %arg4[%c0_15, %c0_16, %c0_17, %c0_18], %45 {strides = array<i32>} : memref<2x4x3x3xf32, #tpu.memory_space<vmem>>, vector<2x1x3x3xf32>,
    %47 = vector.shape_cast %31 : vector<2x13x13xf32> to vector<2x1x13x13xf32>
    %c0_19 = arith.constant 0 : index
    %c1 = arith.constant 1 : index
    %c0_20 = arith.constant 0 : index
    %c0_21 = arith.constant 0 : index
    %48 = vector.load %arg2[%c0_19, %c1, %c0_20, %c0_21] : memref<2x4x13x13xf32, #tpu.memory_space<vmem>>, vector<2x1x13x13xf32>
    tpu.vector_store %arg2[%c0_19, %c1, %c0_20, %c0_21], %47 {strides = array<i32>} : memref<2x4x13x13xf32, #tpu.memory_space<vmem>>, vector<2x1x13x13xf32>,
    %cst_22 = arith.constant 0.000000e+00 : f32
    %49 = vector.broadcast %cst_22 : f32 to vector<2x13x13xf32>
    %50 = arith.maximumf %31, %49 : vector<2x13x13xf32>
    %51 = vector.shape_cast %50 : vector<2x13x13xf32> to vector<2x1x13x13xf32>
    %c0_23 = arith.constant 0 : index
    %c1_24 = arith.constant 1 : index
    %c0_25 = arith.constant 0 : index
    %c0_26 = arith.constant 0 : index
    %52 = vector.load %arg3[%c0_23, %c1_24, %c0_25, %c0_26] : memref<2x4x13x13xf32, #tpu.memory_space<vmem>>, vector<2x1x13x13xf32>
    tpu.vector_store %arg3[%c0_23, %c1_24, %c0_25, %c0_26], %51 {strides = array<i32>} : memref<2x4x13x13xf32, #tpu.memory_space<vmem>>, vector<2x1x13x13xf32>,
    %53 = vector.extract_strided_slice %50 {offsets = [0, 0, 0], sizes = [2, 12, 12], strides = [1, 1, 1]} : vector<2x13x13xf32> to vector<2x12x12xf32>
    %54 = vector.shape_cast %53 : vector<2x12x12xf32> to vector<2x3x4x12xf32>
    %cst_27 = arith.constant dense<0xFF800000> : vector<2x3x12xf32>
    %55 = vector.multi_reduction <maximumf>, %54, %cst_27 [2] : vector<2x3x4x12xf32> to vector<2x3x12xf32>
    %56 = vector.shape_cast %55 : vector<2x3x12xf32> to vector<2x3x3x4xf32>
    %cst_28 = arith.constant dense<0xFF800000> : vector<2x3x3xf32>
    %57 = vector.multi_reduction <maximumf>, %56, %cst_28 [3] : vector<2x3x3x4xf32> to vector<2x3x3xf32>
    %58 = vector.shape_cast %57 : vector<2x3x3xf32> to vector<2x1x3x3xf32>
    %c0_29 = arith.constant 0 : index
    %c1_30 = arith.constant 1 : index
    %c0_31 = arith.constant 0 : index
    %c0_32 = arith.constant 0 : index
    %59 = vector.load %arg4[%c0_29, %c1_30, %c0_31, %c0_32] : memref<2x4x3x3xf32, #tpu.memory_space<vmem>>, vector<2x1x3x3xf32>
    tpu.vector_store %arg4[%c0_29, %c1_30, %c0_31, %c0_32], %58 {strides = array<i32>} : memref<2x4x3x3xf32, #tpu.memory_space<vmem>>, vector<2x1x3x3xf32>,
    %60 = vector.shape_cast %29 : vector<2x13x13xf32> to vector<2x1x13x13xf32>
    %c0_33 = arith.constant 0 : index
    %c2 = arith.constant 2 : index
    %c0_34 = arith.constant 0 : index
    %c0_35 = arith.constant 0 : index
    %61 = vector.load %arg2[%c0_33, %c2, %c0_34, %c0_35] : memref<2x4x13x13xf32, #tpu.memory_space<vmem>>, vector<2x1x13x13xf32>
    tpu.vector_store %arg2[%c0_33, %c2, %c0_34, %c0_35], %60 {strides = array<i32>} : memref<2x4x13x13xf32, #tpu.memory_space<vmem>>, vector<2x1x13x13xf32>,
    %cst_36 = arith.constant 0.000000e+00 : f32
    %62 = vector.broadcast %cst_36 : f32 to vector<2x13x13xf32>
    %63 = arith.maximumf %29, %62 : vector<2x13x13xf32>
    %64 = vector.shape_cast %63 : vector<2x13x13xf32> to vector<2x1x13x13xf32>
    %c0_37 = arith.constant 0 : index
    %c2_38 = arith.constant 2 : index
    %c0_39 = arith.constant 0 : index
    %c0_40 = arith.constant 0 : index
    %65 = vector.load %arg3[%c0_37, %c2_38, %c0_39, %c0_40] : memref<2x4x13x13xf32, #tpu.memory_space<vmem>>, vector<2x1x13x13xf32>
    tpu.vector_store %arg3[%c0_37, %c2_38, %c0_39, %c0_40], %64 {strides = array<i32>} : memref<2x4x13x13xf32, #tpu.memory_space<vmem>>, vector<2x1x13x13xf32>,
    %66 = vector.extract_strided_slice %63 {offsets = [0, 0, 0], sizes = [2, 12, 12], strides = [1, 1, 1]} : vector<2x13x13xf32> to vector<2x12x12xf32>
    %67 = vector.shape_cast %66 : vector<2x12x12xf32> to vector<2x3x4x12xf32>
    %cst_41 = arith.constant dense<0xFF800000> : vector<2x3x12xf32>
    %68 = vector.multi_reduction <maximumf>, %67, %cst_41 [2] : vector<2x3x4x12xf32> to vector<2x3x12xf32>
    %69 = vector.shape_cast %68 : vector<2x3x12xf32> to vector<2x3x3x4xf32>
    %cst_42 = arith.constant dense<0xFF800000> : vector<2x3x3xf32>
    %70 = vector.multi_reduction <maximumf>, %69, %cst_42 [3] : vector<2x3x3x4xf32> to vector<2x3x3xf32>
    %71 = vector.shape_cast %70 : vector<2x3x3xf32> to vector<2x1x3x3xf32>
    %c0_43 = arith.constant 0 : index
    %c2_44 = arith.constant 2 : index
    %c0_45 = arith.constant 0 : index
    %c0_46 = arith.constant 0 : index
    %72 = vector.load %arg4[%c0_43, %c2_44, %c0_45, %c0_46] : memref<2x4x3x3xf32, #tpu.memory_space<vmem>>, vector<2x1x3x3xf32>
    tpu.vector_store %arg4[%c0_43, %c2_44, %c0_45, %c0_46], %71 {strides = array<i32>} : memref<2x4x3x3xf32, #tpu.memory_space<vmem>>, vector<2x1x3x3xf32>,
    %73 = vector.shape_cast %33 : vector<2x13x13xf32> to vector<2x1x13x13xf32>
    %c0_47 = arith.constant 0 : index
    %c3 = arith.constant 3 : index
    %c0_48 = arith.constant 0 : index
    %c0_49 = arith.constant 0 : index
    %74 = vector.load %arg2[%c0_47, %c3, %c0_48, %c0_49] : memref<2x4x13x13xf32, #tpu.memory_space<vmem>>, vector<2x1x13x13xf32>
    tpu.vector_store %arg2[%c0_47, %c3, %c0_48, %c0_49], %73 {strides = array<i32>} : memref<2x4x13x13xf32, #tpu.memory_space<vmem>>, vector<2x1x13x13xf32>,
    %cst_50 = arith.constant 0.000000e+00 : f32
    %75 = vector.broadcast %cst_50 : f32 to vector<2x13x13xf32>
    %76 = arith.maximumf %33, %75 : vector<2x13x13xf32>
    %77 = vector.shape_cast %76 : vector<2x13x13xf32> to vector<2x1x13x13xf32>
    %c0_51 = arith.constant 0 : index
    %c3_52 = arith.constant 3 : index
    %c0_53 = arith.constant 0 : index
    %c0_54 = arith.constant 0 : index
    %78 = vector.load %arg3[%c0_51, %c3_52, %c0_53, %c0_54] : memref<2x4x13x13xf32, #tpu.memory_space<vmem>>, vector<2x1x13x13xf32>
    tpu.vector_store %arg3[%c0_51, %c3_52, %c0_53, %c0_54], %77 {strides = array<i32>} : memref<2x4x13x13xf32, #tpu.memory_space<vmem>>, vector<2x1x13x13xf32>,
    %79 = vector.extract_strided_slice %76 {offsets = [0, 0, 0], sizes = [2, 12, 12], strides = [1, 1, 1]} : vector<2x13x13xf32> to vector<2x12x12xf32>
    %80 = vector.shape_cast %79 : vector<2x12x12xf32> to vector<2x3x4x12xf32>
    %cst_55 = arith.constant dense<0xFF800000> : vector<2x3x12xf32>
    %81 = vector.multi_reduction <maximumf>, %80, %cst_55 [2] : vector<2x3x4x12xf32> to vector<2x3x12xf32>
    %82 = vector.shape_cast %81 : vector<2x3x12xf32> to vector<2x3x3x4xf32>
    %cst_56 = arith.constant dense<0xFF800000> : vector<2x3x3xf32>
    %83 = vector.multi_reduction <maximumf>, %82, %cst_56 [3] : vector<2x3x3x4xf32> to vector<2x3x3xf32>
    %84 = vector.shape_cast %83 : vector<2x3x3xf32> to vector<2x1x3x3xf32>
    %c0_57 = arith.constant 0 : index
    %c3_58 = arith.constant 3 : index
    %c0_59 = arith.constant 0 : index
    %c0_60 = arith.constant 0 : index
    %85 = vector.load %arg4[%c0_57, %c3_58, %c0_59, %c0_60] : memref<2x4x3x3xf32, #tpu.memory_space<vmem>>, vector<2x1x3x3xf32>
    tpu.vector_store %arg4[%c0_57, %c3_58, %c0_59, %c0_60], %84 {strides = array<i32>} : memref<2x4x3x3xf32, #tpu.memory_space<vmem>>, vector<2x1x3x3xf32>,
    return
  }
  func.func @transform_0(%arg0: i32) -> (i32, i32, i32, i32) {
    %c0_i32 = arith.constant 0 : i32
    %c0_i32_0 = arith.constant 0 : i32
    %c0_i32_1 = arith.constant 0 : i32
    %c0_i32_2 = arith.constant 0 : i32
    return %arg0, %c0_i32, %c0_i32_0, %c0_i32_1 : i32, i32, i32, i32
  }
  func.func @transform_1(%arg0: i32) -> (i32, i32, i32, i32) {
    %c0_i32 = arith.constant 0 : i32
    %c0_i32_0 = arith.constant 0 : i32
    %c0_i32_1 = arith.constant 0 : i32
    %c0_i32_2 = arith.constant 0 : i32
    return %arg0, %c0_i32, %c0_i32_0, %c0_i32_1 : i32, i32, i32, i32
  }
  func.func @transform_2(%arg0: i32) -> (i32, i32, i32, i32) {
    %c0_i32 = arith.constant 0 : i32
    %c0_i32_0 = arith.constant 0 : i32
    %c0_i32_1 = arith.constant 0 : i32
    %c0_i32_2 = arith.constant 0 : i32
    return %arg0, %c0_i32, %c0_i32_0, %c0_i32_1 : i32, i32, i32, i32
  }
  func.func @transform_3(%arg0: i32) -> (i32, i32, i32, i32) {
    %c0_i32 = arith.constant 0 : i32
    %c0_i32_0 = arith.constant 0 : i32
    %c0_i32_1 = arith.constant 0 : i32
    %c0_i32_2 = arith.constant 0 : i32
    return %arg0, %c0_i32, %c0_i32_0, %c0_i32_1 : i32, i32, i32, i32
  }
}

</mosaic_0001>

<llo_original>
// kernel: tpu_custom_call.1
$region0: #{tpu_custom_call.1}
  #allocation0 [shape = 'u32[]', space=smem, size = 0x4, offset = 0x4, fixed_abs, tag = 'smem constant byte address 0x4 - core index']
  #allocation1 [shape = 'u32[144,128]{1,0:T(1,128)}', space=vmem, size = 0x12000, scoped, tag = 'internal scratch']
  %s0 = inlined_call_operand.hbm [shape: f32[2,1,16,16], index: 0, kind: input, shape index: {}]
  %s1 = inlined_call_operand.vmem [shape: f32[2,4,13,13], index: 1, kind: output, shape index: {0}]
  %s2 = inlined_call_operand.vmem [shape: f32[2,4,13,13], index: 2, kind: output, shape index: {1}]
  %s3 = inlined_call_operand.vmem [shape: f32[2,4,3,3], index: 3, kind: output, shape index: {2}]
  %4 = xla_tuple %s1, %s2, %s3
  %s5 = sld [smem:[#allocation0]]
  $region34: #{tpu_custom_call.1} parent=0
    _
  %s7 = ssub.s32 1, %s5
  %s8 = scalar_select 0, %s7, %s5
  $region1: #{tpu_custom_call.1} parent=0
    #allocation2 [shape = 'u8[16384]{0}', space=vmem, size = 0x4000, scoped, tag = 'input window, operand 0, single buffered']
    #allocation3 [shape = 's32[1]{0}', space=sflag, size = 0x4, scoped, tag = 'scoped memory for tpu_custom_call.1']
    %9 = vsyncpa [#allocation3], 0
    // Predicated region
    $region2: #{tpu_custom_call.1} parent=1 // pred_check
      _
    $region3: #{tpu_custom_call.1} parent=1 // pred_check_branch
      %11 = sbr.rel (0) target = $region5
    $region4: #{tpu_custom_call.1} parent=1 // pred_region
      %s13 = ssub.s32 512, 512
      %14 = vsyncadd [#allocation3], %s13
      %s15 = sshll.u32 [#allocation2], 4
      %s16 = int_to_ptr.vmem [resolvable:$true] %s15
      %21 = dma.hbm_to_vmem [thread:$0]  %s0, 512, %s16, [#allocation3], 128, 128, 8
    $region5: #{tpu_custom_call.1} parent=1 // pred_fallthru
      _
    // Predicated region
    $region6: #{tpu_custom_call.1} parent=1 // pred_check
      _
    $region7: #{tpu_custom_call.1} parent=1 // pred_check_branch
      %23 = sbr.rel (0) target = $region9
    $region8: #{tpu_custom_call.1} parent=1 // pred_region
      %24 = dma.done [#allocation3], 512
    $region9: #{tpu_custom_call.1} parent=1 // pred_fallthru
      _
    %v25 = vld [vmem:[#allocation2] sm:$0xff]
    %v26 = vld [vmem:[#allocation2 + $0x8] sm:$0xff]
    %v27 = vld [vmem:[#allocation2 + $0x10] sm:$0xff]
    %v28 = vld [vmem:[#allocation2 + $0x18] sm:$0xff]
    %vm33 = vcmask 1046528
    %v34 = vrot.slane %v25, 1
    %v35 = vrot.slane %v26, 1
    %v36 = vsel %vm33, %v34, %v35
    %v37 = vrot.slane %v27, 1
    %v38 = vrot.slane %v28, 1
    %v39 = vsel %vm33, %v37, %v38
    %v44 = vadd.f32 %v25, %v36
    %v45 = vadd.f32 %v26, %v35
    %v46 = vadd.f32 %v27, %v39
    %v47 = vadd.f32 %v28, %v38
    %vm48 = vcmask 1045504
    %v49 = vrot.slane %v25, 2
    %v50 = vrot.slane %v26, 2
    %v51 = vsel %vm48, %v49, %v50
    %v52 = vrot.slane %v27, 2
    %v53 = vrot.slane %v28, 2
    %v54 = vsel %vm48, %v52, %v53
    %v59 = vadd.f32 %v44, %v51
    %v60 = vadd.f32 %v45, %v50
    %v61 = vadd.f32 %v46, %v54
    %v62 = vadd.f32 %v47, %v53
    %vm63 = vcmask 1044480
    %v64 = vrot.slane %v25, 3
    %v65 = vrot.slane %v26, 3
    %v66 = vsel %vm63, %v64, %v65
    %v67 = vrot.slane %v27, 3
    %v68 = vrot.slane %v28, 3
    %v69 = vsel %vm63, %v67, %v68
    %v74 = vadd.f32 %v59, %v66
    %v75 = vadd.f32 %v60, %v65
    %v76 = vadd.f32 %v61, %v69
    %v77 = vadd.f32 %v62, %v68
    %78 = vrot.lane.b32.xlu0 %v25, 127
    %v79 = vpop.permute.xlu0 %78
    %80 = vrot.lane.b32.xlu0 %v26, 127
    %v81 = vpop.permute.xlu0 %80
    %82 = vrot.lane.b32.xlu0 %v27, 127
    %v83 = vpop.permute.xlu0 %82
    %84 = vrot.lane.b32.xlu0 %v28, 127
    %v85 = vpop.permute.xlu0 %84
    %v90 = vadd.f32 %v25, %v79
    %v91 = vadd.f32 %v26, %v81
    %v92 = vadd.f32 %v27, %v83
    %v93 = vadd.f32 %v28, %v85
    %94 = vrot.lane.b32.xlu0 %v25, 126
    %v95 = vpop.permute.xlu0 %94
    %96 = vrot.lane.b32.xlu0 %v26, 126
    %v97 = vpop.permute.xlu0 %96
    %98 = vrot.lane.b32.xlu0 %v27, 126
    %v99 = vpop.permute.xlu0 %98
    %100 = vrot.lane.b32.xlu0 %v28, 126
    %v101 = vpop.permute.xlu0 %100
    %v106 = vadd.f32 %v90, %v95
    %v107 = vadd.f32 %v91, %v97
    %v108 = vadd.f32 %v92, %v99
    %v109 = vadd.f32 %v93, %v101
    %110 = vrot.lane.b32.xlu0 %v25, 125
    %v111 = vpop.permute.xlu0 %110
    %112 = vrot.lane.b32.xlu0 %v26, 125
    %v113 = vpop.permute.xlu0 %112
    %114 = vrot.lane.b32.xlu0 %v27, 125
    %v115 = vpop.permute.xlu0 %114
    %116 = vrot.lane.b32.xlu0 %v28, 125
    %v117 = vpop.permute.xlu0 %116
    %v122 = vadd.f32 %v106, %v111
    %v123 = vadd.f32 %v107, %v113
    %v124 = vadd.f32 %v108, %v115
    %v125 = vadd.f32 %v109, %v117
    %130 = vrot.lane.b32.xlu0 %v74, 127
    %v131 = vpop.permute.xlu0 %130
    %132 = vrot.lane.b32.xlu0 %v75, 127
    %v133 = vpop.permute.xlu0 %132
    %134 = vrot.lane.b32.xlu0 %v76, 127
    %v135 = vpop.permute.xlu0 %134
    %136 = vrot.lane.b32.xlu0 %v77, 127
    %v137 = vpop.permute.xlu0 %136
    %v142 = vadd.f32 %v74, %v131
    %v143 = vadd.f32 %v75, %v133
    %v144 = vadd.f32 %v76, %v135
    %v145 = vadd.f32 %v77, %v137
    %150 = vrot.lane.b32.xlu0 %v142, 2
    %v151 = vpop.permute.xlu0 %150
    %152 = vrot.lane.b32.xlu0 %v143, 2
    %v153 = vpop.permute.xlu0 %152
    %154 = vrot.lane.b32.xlu0 %v144, 2
    %v155 = vpop.permute.xlu0 %154
    %156 = vrot.lane.b32.xlu0 %v145, 2
    %v157 = vpop.permute.xlu0 %156
    %v162 = vsub.f32 %v142, %v151
    %v163 = vsub.f32 %v143, %v153
    %v164 = vsub.f32 %v144, %v155
    %v165 = vsub.f32 %v145, %v157
    %v170 = vrot.slane %v122, 1
    %v171 = vrot.slane %v123, 1
    %v172 = vsel %vm33, %v170, %v171
    %v173 = vrot.slane %v124, 1
    %v174 = vrot.slane %v125, 1
    %v175 = vsel %vm33, %v173, %v174
    %v180 = vadd.f32 %v122, %v172
    %v181 = vadd.f32 %v123, %v171
    %v182 = vadd.f32 %v124, %v175
    %v183 = vadd.f32 %v125, %v174
    %vm188 = vcmask 1041408
    %v189 = vrot.slane %v180, 6
    %v190 = vrot.slane %v181, 6
    %v191 = vsel %vm188, %v189, %v190
    %v192 = vrot.slane %v182, 6
    %v193 = vrot.slane %v183, 6
    %v194 = vsel %vm188, %v192, %v193
    %v199 = vsub.f32 %v180, %v189
    %v200 = vsub.f32 %v181, %v191
    %v201 = vsub.f32 %v182, %v192
    %v202 = vsub.f32 %v183, %v194
    %v203 = vsub.f32 0.0, %v162
    %v204 = vsub.f32 0.0, %v163
    %v205 = vsub.f32 0.0, %v164
    %v206 = vsub.f32 0.0, %v165
    %v207 = vsub.f32 0.0, %v199
    %v208 = vsub.f32 0.0, %v200
    %v209 = vsub.f32 0.0, %v201
    %v210 = vsub.f32 0.0, %v202
    %215 = vrot.lane.b32.xlu0 %v162, 126
    %v216 = vpop.permute.xlu0 %215
    %217 = vrot.lane.b32.xlu0 %v163, 126
    %v218 = vpop.permute.xlu0 %217
    %219 = vrot.lane.b32.xlu0 %v164, 126
    %v220 = vpop.permute.xlu0 %219
    %221 = vrot.lane.b32.xlu0 %v165, 126
    %v222 = vpop.permute.xlu0 %221
    %vm227 = vcmask 105472
    %228 = vst.msk [vmem:[%s1] sm:$0xff] %vm227, %v216
    %vm229 = vcmask 102400
    %230 = vst.msk [vmem:[%s1 + $0x8] sm:$0x1f] %vm229, %v218
    %231 = vst.msk [vmem:[%s1 + $0x40] sm:$0xff] %vm227, %v220
    %232 = vst.msk [vmem:[%s1 + $0x48] sm:$0x1f] %vm229, %v222
    %v233 = vmax.f32 %v162, 0.0
    %v234 = vmax.f32 %v163, 0.0
    %v235 = vmax.f32 %v164, 0.0
    %v236 = vmax.f32 %v165, 0.0
    %241 = vrot.lane.b32.xlu0 %v233, 126
    %v242 = vpop.permute.xlu0 %241
    %243 = vrot.lane.b32.xlu0 %v234, 126
    %v244 = vpop.permute.xlu0 %243
    %245 = vrot.lane.b32.xlu0 %v235, 126
    %v246 = vpop.permute.xlu0 %245
    %247 = vrot.lane.b32.xlu0 %v236, 126
    %v248 = vpop.permute.xlu0 %247
    %253 = vst.msk [vmem:[%s2] sm:$0xff] %vm227, %v242
    %254 = vst.msk [vmem:[%s2 + $0x8] sm:$0x1f] %vm229, %v244
    %255 = vst.msk [vmem:[%s2 + $0x40] sm:$0xff] %vm227, %v246
    %256 = vst.msk [vmem:[%s2 + $0x48] sm:$0x1f] %vm229, %v248
    %v257 = vcombine.high %v233, %v233
    %v258 = vcombine.high %v235, %v235
    %vm261 = vcmask 109584
    %v262 = vsel %vm261, %v233, -inf
    %v263 = vrot.slane %v262, 4
    %v264 = vmax.f32 %v262, %v263
    %v265 = vrot.slane %v264, 2
    %v266 = vmax.f32 %v264, %v265
    %v267 = vrot.slane %v266, 1
    %v268 = vmax.f32 %v266, %v267
    %v269 = vsel %vm261, %v257, -inf
    %v270 = vrot.slane %v269, 4
    %v271 = vmax.f32 %v269, %v270
    %v272 = vrot.slane %v271, 2
    %v273 = vmax.f32 %v271, %v272
    %v274 = vrot.slane %v273, 1
    %v275 = vmax.f32 %v273, %v274
    %v276 = vsel %vm261, %v234, -inf
    %v277 = vrot.slane %v276, 4
    %v278 = vmax.f32 %v276, %v277
    %v279 = vrot.slane %v278, 2
    %v280 = vmax.f32 %v278, %v279
    %v281 = vrot.slane %v280, 1
    %v282 = vmax.f32 %v280, %v281
    %v283 = vsel %vm261, %v235, -inf
    %v284 = vrot.slane %v283, 4
    %v285 = vmax.f32 %v283, %v284
    %v286 = vrot.slane %v285, 2
    %v287 = vmax.f32 %v285, %v286
    %v288 = vrot.slane %v287, 1
    %v289 = vmax.f32 %v287, %v288
    %v290 = vsel %vm261, %v258, -inf
    %v291 = vrot.slane %v290, 4
    %v292 = vmax.f32 %v290, %v291
    %v293 = vrot.slane %v292, 2
    %v294 = vmax.f32 %v292, %v293
    %v295 = vrot.slane %v294, 1
    %v296 = vmax.f32 %v294, %v295
    %v297 = vsel %vm261, %v236, -inf
    %v298 = vrot.slane %v297, 4
    %v299 = vmax.f32 %v297, %v298
    %v300 = vrot.slane %v299, 2
    %v301 = vmax.f32 %v299, %v300
    %v302 = vrot.slane %v301, 1
    %v303 = vmax.f32 %v301, %v302
    %310 = vrot.lane.b32.xlu0 %v268, 124
    %v311 = vpop.permute.xlu0 %310
    %312 = vrot.lane.b32.xlu0 %v275, 124
    %v313 = vpop.permute.xlu0 %312
    %314 = vrot.lane.b32.xlu0 %v282, 124
    %v315 = vpop.permute.xlu0 %314
    %316 = vrot.lane.b32.xlu0 %v289, 124
    %v317 = vpop.permute.xlu0 %316
    %318 = vrot.lane.b32.xlu0 %v296, 124
    %v319 = vpop.permute.xlu0 %318
    %320 = vrot.lane.b32.xlu0 %v303, 124
    %v321 = vpop.permute.xlu0 %320
    %322 = vrot.lane.b32.xlu0 %v268, 120
    %v323 = vpop.permute.xlu0 %322
    %324 = vrot.lane.b32.xlu0 %v275, 120
    %v325 = vpop.permute.xlu0 %324
    %326 = vrot.lane.b32.xlu0 %v282, 120
    %v327 = vpop.permute.xlu0 %326
    %328 = vrot.lane.b32.xlu0 %v289, 120
    %v329 = vpop.permute.xlu0 %328
    %330 = vrot.lane.b32.xlu0 %v296, 120
    %v331 = vpop.permute.xlu0 %330
    %332 = vrot.lane.b32.xlu0 %v303, 120
    %v333 = vpop.permute.xlu0 %332
    %v334 = vrot.slane %v275, 7
    %vm335 = vcmask 1041409
    %v336 = vsel %vm335, %v334, %v268
    %v337 = vrot.slane %v282, 6
    %vm338 = vcmask 1042434
    %v339 = vsel %vm338, %v337, %v336
    %v340 = vrot.slane %v313, 7
    %v341 = vsel %vm335, %v340, %v311
    %v342 = vrot.slane %v315, 6
    %v343 = vsel %vm338, %v342, %v341
    %v344 = vrot.slane %v325, 7
    %v345 = vsel %vm335, %v344, %v323
    %v346 = vrot.slane %v327, 6
    %v347 = vsel %vm338, %v346, %v345
    %v348 = vrot.slane %v296, 7
    %v349 = vsel %vm335, %v348, %v289
    %v350 = vrot.slane %v303, 6
    %v351 = vsel %vm338, %v350, %v349
    %v352 = vrot.slane %v319, 7
    %v353 = vsel %vm335, %v352, %v317
    %v354 = vrot.slane %v321, 6
    %v355 = vsel %vm338, %v354, %v353
    %v356 = vrot.slane %v331, 7
    %v357 = vsel %vm335, %v356, %v329
    %v358 = vrot.slane %v333, 6
    %v359 = vsel %vm338, %v358, %v357
    %360 = vrot.lane.b32.xlu0 %v339, 126
    %v361 = vpop.permute.xlu0 %360
    %362 = vrot.lane.b32.xlu0 %v343, 126
    %v363 = vpop.permute.xlu0 %362
    %364 = vrot.lane.b32.xlu0 %v347, 126
    %v365 = vpop.permute.xlu0 %364
    %366 = vrot.lane.b32.xlu0 %v351, 126
    %v367 = vpop.permute.xlu0 %366
    %368 = vrot.lane.b32.xlu0 %v355, 126
    %v369 = vpop.permute.xlu0 %368
    %370 = vrot.lane.b32.xlu0 %v359, 126
    %v371 = vpop.permute.xlu0 %370
    %v376 = vcombine.low %v361, %v365
    %v378 = vunpack.c.l.s4 1983009808
    %v379 = vunpack.c.0.s8 %v378
    %v380 = vlaneseq
    %v381 = vshrl.u32 %v380, 7
    %v382 = vsub.s32 %v379, %v381
    %v383 = vrot.slane %v376, %v382
    %v386 = vunpack.c.l.s4 1983009808
    %v387 = vunpack.c.0.s8 %v386
    %v388 = vlaneseq
    %v389 = vshrl.u32 %v388, 7
    %v390 = vsub.s32 %v387, %v389
    %v391 = vrot.slane %v363, %v390
    %v392 = vcombine.low %v383, %v391
    %v393 = vcombine.high %v383, %v391
    %v395 = vunpack.c.l.s4 1934713408
    %v396 = vunpack.c.0.s8 %v395
    %v397 = vlaneseq
    %v398 = vshrl.u32 %v397, 7
    %v399 = vsub.s32 %v396, %v398
    %v400 = vrot.slane %v392, %v399
    %v401 = vcombine.high %v400, 0.0
    %v403 = vunpack.c.l.s4 1934713408
    %v404 = vunpack.c.0.s8 %v403
    %v405 = vlaneseq
    %v406 = vshrl.u32 %v405, 7
    %v407 = vsub.s32 %v404, %v406
    %v408 = vrot.slane %v393, %v407
    %v409 = vcombine.low %v367, %v371
    %v411 = vunpack.c.l.s4 1983009808
    %v412 = vunpack.c.0.s8 %v411
    %v413 = vlaneseq
    %v414 = vshrl.u32 %v413, 7
    %v415 = vsub.s32 %v412, %v414
    %v416 = vrot.slane %v409, %v415
    %v419 = vunpack.c.l.s4 1983009808
    %v420 = vunpack.c.0.s8 %v419
    %v421 = vlaneseq
    %v422 = vshrl.u32 %v421, 7
    %v423 = vsub.s32 %v420, %v422
    %v424 = vrot.slane %v369, %v423
    %v425 = vcombine.low %v416, %v424
    %v426 = vcombine.high %v416, %v424
    %v428 = vunpack.c.l.s4 1934713408
    %v429 = vunpack.c.0.s8 %v428
    %v430 = vlaneseq
    %v431 = vshrl.u32 %v430, 7
    %v432 = vsub.s32 %v429, %v431
    %v433 = vrot.slane %v425, %v432
    %v434 = vcombine.high %v433, 0.0
    %v436 = vunpack.c.l.s4 1934713408
    %v437 = vunpack.c.0.s8 %v436
    %v438 = vlaneseq
    %v439 = vshrl.u32 %v438, 7
    %v440 = vsub.s32 %v437, %v439
    %v441 = vrot.slane %v426, %v440
    %vm442 = vcmask 26624
    %v443 = vsel %vm442, %v400, -inf
    %444 = vmax.xlane.f32.xlu0 %v443
    %v445 = vpop.xlane.xlu0 %444
    %v446 = vsel %vm442, %v401, -inf
    %447 = vmax.xlane.f32.xlu0 %v446
    %v448 = vpop.xlane.xlu0 %447
    %v449 = vsel %vm442, %v408, -inf
    %450 = vmax.xlane.f32.xlu0 %v449
    %v451 = vpop.xlane.xlu0 %450
    %v452 = vsel %vm442, %v433, -inf
    %453 = vmax.xlane.f32.xlu0 %v452
    %v454 = vpop.xlane.xlu0 %453
    %v455 = vsel %vm442, %v434, -inf
    %456 = vmax.xlane.f32.xlu0 %v455
    %v457 = vpop.xlane.xlu0 %456
    %v458 = vsel %vm442, %v441, -inf
    %459 = vmax.xlane.f32.xlu0 %v458
    %v460 = vpop.xlane.xlu0 %459
    %v467 = vlaneseq
    %v468 = vand.u32 %v467, 127
    %v469 = vlaneseq
    %v470 = vshrl.u32 %v469, 7
    %v471 = vsub.s32 %v468, %v470
    %v472 = vrot.slane %v445, %v471
    %v473 = vlaneseq
    %v474 = vshrl.u32 %v473, 7
    %v475 = vsub.s32 %v468, %v474
    %v476 = vrot.slane %v448, %v475
    %v477 = vlaneseq
    %v478 = vshrl.u32 %v477, 7
    %v479 = vsub.s32 %v468, %v478
    %v480 = vrot.slane %v451, %v479
    %v481 = vlaneseq
    %v482 = vshrl.u32 %v481, 7
    %v483 = vsub.s32 %v468, %v482
    %v484 = vrot.slane %v454, %v483
    %v485 = vlaneseq
    %v486 = vshrl.u32 %v485, 7
    %v487 = vsub.s32 %v468, %v486
    %v488 = vrot.slane %v457, %v487
    %v489 = vlaneseq
    %v490 = vshrl.u32 %v489, 7
    %v491 = vsub.s32 %v468, %v490
    %v492 = vrot.slane %v460, %v491
    %v493 = vsel %vm335, %v476, %v472
    %v494 = vsel %vm338, %v480, %v493
    %v495 = vsel %vm335, %v488, %v484
    %v496 = vsel %vm338, %v492, %v495
    %vm499 = vcmask 18432
    %500 = vst.msk [vmem:[%s3] sm:$0x7] %vm499, %v494
    %501 = vst.msk [vmem:[%s3 + $0x10] sm:$0x7] %vm499, %v496
    %506 = vrot.lane.b32.xlu0 %v203, 126
    %v507 = vpop.permute.xlu0 %506
    %508 = vrot.lane.b32.xlu0 %v204, 126
    %v509 = vpop.permute.xlu0 %508
    %510 = vrot.lane.b32.xlu0 %v205, 126
    %v511 = vpop.permute.xlu0 %510
    %512 = vrot.lane.b32.xlu0 %v206, 126
    %v513 = vpop.permute.xlu0 %512
    %s518 = scalar_lea.vmem %s1, 16
    %519 = vst.msk [vmem:[%s518] sm:$0xff] %vm227, %v507
    %520 = vst.msk [vmem:[%s518 + $0x8] sm:$0x1f] %vm229, %v509
    %521 = vst.msk [vmem:[%s518 + $0x40] sm:$0xff] %vm227, %v511
    %522 = vst.msk [vmem:[%s518 + $0x48] sm:$0x1f] %vm229, %v513
    %v523 = vmax.f32 %v203, 0.0
    %v524 = vmax.f32 %v204, 0.0
    %v525 = vmax.f32 %v205, 0.0
    %v526 = vmax.f32 %v206, 0.0
    %531 = vrot.lane.b32.xlu0 %v523, 126
    %v532 = vpop.permute.xlu0 %531
    %533 = vrot.lane.b32.xlu0 %v524, 126
    %v534 = vpop.permute.xlu0 %533
    %535 = vrot.lane.b32.xlu0 %v525, 126
    %v536 = vpop.permute.xlu0 %535
    %537 = vrot.lane.b32.xlu0 %v526, 126
    %v538 = vpop.permute.xlu0 %537
    %s543 = scalar_lea.vmem %s2, 16
    %544 = vst.msk [vmem:[%s543] sm:$0xff] %vm227, %v532
    %545 = vst.msk [vmem:[%s543 + $0x8] sm:$0x1f] %vm229, %v534
    %546 = vst.msk [vmem:[%s543 + $0x40] sm:$0xff] %vm227, %v536
    %547 = vst.msk [vmem:[%s543 + $0x48] sm:$0x1f] %vm229, %v538
    %v548 = vcombine.high %v523, %v523
    %v549 = vcombine.high %v525, %v525
    %v552 = vsel %vm261, %v523, -inf
    %v553 = vrot.slane %v552, 4
    %v554 = vmax.f32 %v552, %v553
    %v555 = vrot.slane %v554, 2
    %v556 = vmax.f32 %v554, %v555
    %v557 = vrot.slane %v556, 1
    %v558 = vmax.f32 %v556, %v557
    %v559 = vsel %vm261, %v548, -inf
    %v560 = vrot.slane %v559, 4
    %v561 = vmax.f32 %v559, %v560
    %v562 = vrot.slane %v561, 2
    %v563 = vmax.f32 %v561, %v562
    %v564 = vrot.slane %v563, 1
    %v565 = vmax.f32 %v563, %v564
    %v566 = vsel %vm261, %v524, -inf
    %v567 = vrot.slane %v566, 4
    %v568 = vmax.f32 %v566, %v567
    %v569 = vrot.slane %v568, 2
    %v570 = vmax.f32 %v568, %v569
    %v571 = vrot.slane %v570, 1
    %v572 = vmax.f32 %v570, %v571
    %v573 = vsel %vm261, %v525, -inf
    %v574 = vrot.slane %v573, 4
    %v575 = vmax.f32 %v573, %v574
    %v576 = vrot.slane %v575, 2
    %v577 = vmax.f32 %v575, %v576
    %v578 = vrot.slane %v577, 1
    %v579 = vmax.f32 %v577, %v578
    %v580 = vsel %vm261, %v549, -inf
    %v581 = vrot.slane %v580, 4
    %v582 = vmax.f32 %v580, %v581
    %v583 = vrot.slane %v582, 2
    %v584 = vmax.f32 %v582, %v583
    %v585 = vrot.slane %v584, 1
    %v586 = vmax.f32 %v584, %v585
    %v587 = vsel %vm261, %v526, -inf
    %v588 = vrot.slane %v587, 4
    %v589 = vmax.f32 %v587, %v588
    %v590 = vrot.slane %v589, 2
    %v591 = vmax.f32 %v589, %v590
    %v592 = vrot.slane %v591, 1
    %v593 = vmax.f32 %v591, %v592
    %600 = vrot.lane.b32.xlu0 %v558, 124
    %v601 = vpop.permute.xlu0 %600
    %602 = vrot.lane.b32.xlu0 %v565, 124
    %v603 = vpop.permute.xlu0 %602
    %604 = vrot.lane.b32.xlu0 %v572, 124
    %v605 = vpop.permute.xlu0 %604
    %606 = vrot.lane.b32.xlu0 %v579, 124
    %v607 = vpop.permute.xlu0 %606
    %608 = vrot.lane.b32.xlu0 %v586, 124
    %v609 = vpop.permute.xlu0 %608
    %610 = vrot.lane.b32.xlu0 %v593, 124
    %v611 = vpop.permute.xlu0 %610
    %612 = vrot.lane.b32.xlu0 %v558, 120
    %v613 = vpop.permute.xlu0 %612
    %614 = vrot.lane.b32.xlu0 %v565, 120
    %v615 = vpop.permute.xlu0 %614
    %616 = vrot.lane.b32.xlu0 %v572, 120
    %v617 = vpop.permute.xlu0 %616
    %618 = vrot.lane.b32.xlu0 %v579, 120
    %v619 = vpop.permute.xlu0 %618
    %620 = vrot.lane.b32.xlu0 %v586, 120
    %v621 = vpop.permute.xlu0 %620
    %622 = vrot.lane.b32.xlu0 %v593, 120
    %v623 = vpop.permute.xlu0 %622
    %v624 = vrot.slane %v565, 7
    %v625 = vsel %vm335, %v624, %v558
    %v626 = vrot.slane %v572, 6
    %v627 = vsel %vm338, %v626, %v625
    %v628 = vrot.slane %v603, 7
    %v629 = vsel %vm335, %v628, %v601
    %v630 = vrot.slane %v605, 6
    %v631 = vsel %vm338, %v630, %v629
    %v632 = vrot.slane %v615, 7
    %v633 = vsel %vm335, %v632, %v613
    %v634 = vrot.slane %v617, 6
    %v635 = vsel %vm338, %v634, %v633
    %v636 = vrot.slane %v586, 7
    %v637 = vsel %vm335, %v636, %v579
    %v638 = vrot.slane %v593, 6
    %v639 = vsel %vm338, %v638, %v637
    %v640 = vrot.slane %v609, 7
    %v641 = vsel %vm335, %v640, %v607
    %v642 = vrot.slane %v611, 6
    %v643 = vsel %vm338, %v642, %v641
    %v644 = vrot.slane %v621, 7
    %v645 = vsel %vm335, %v644, %v619
    %v646 = vrot.slane %v623, 6
    %v647 = vsel %vm338, %v646, %v645
    %648 = vrot.lane.b32.xlu0 %v627, 126
    %v649 = vpop.permute.xlu0 %648
    %650 = vrot.lane.b32.xlu0 %v631, 126
    %v651 = vpop.permute.xlu0 %650
    %652 = vrot.lane.b32.xlu0 %v635, 126
    %v653 = vpop.permute.xlu0 %652
    %654 = vrot.lane.b32.xlu0 %v639, 126
    %v655 = vpop.permute.xlu0 %654
    %656 = vrot.lane.b32.xlu0 %v643, 126
    %v657 = vpop.permute.xlu0 %656
    %658 = vrot.lane.b32.xlu0 %v647, 126
    %v659 = vpop.permute.xlu0 %658
    %v664 = vcombine.low %v649, %v653
    %v666 = vunpack.c.l.s4 1983009808
    %v667 = vunpack.c.0.s8 %v666
    %v668 = vlaneseq
    %v669 = vshrl.u32 %v668, 7
    %v670 = vsub.s32 %v667, %v669
    %v671 = vrot.slane %v664, %v670
    %v674 = vunpack.c.l.s4 1983009808
    %v675 = vunpack.c.0.s8 %v674
    %v676 = vlaneseq
    %v677 = vshrl.u32 %v676, 7
    %v678 = vsub.s32 %v675, %v677
    %v679 = vrot.slane %v651, %v678
    %v680 = vcombine.low %v671, %v679
    %v681 = vcombine.high %v671, %v679
    %v683 = vunpack.c.l.s4 1934713408
    %v684 = vunpack.c.0.s8 %v683
    %v685 = vlaneseq
    %v686 = vshrl.u32 %v685, 7
    %v687 = vsub.s32 %v684, %v686
    %v688 = vrot.slane %v680, %v687
    %v689 = vcombine.high %v688, 0.0
    %v691 = vunpack.c.l.s4 1934713408
    %v692 = vunpack.c.0.s8 %v691
    %v693 = vlaneseq
    %v694 = vshrl.u32 %v693, 7
    %v695 = vsub.s32 %v692, %v694
    %v696 = vrot.slane %v681, %v695
    %v697 = vcombine.low %v655, %v659
    %v699 = vunpack.c.l.s4 1983009808
    %v700 = vunpack.c.0.s8 %v699
    %v701 = vlaneseq
    %v702 = vshrl.u32 %v701, 7
    %v703 = vsub.s32 %v700, %v702
    %v704 = vrot.slane %v697, %v703
    %v707 = vunpack.c.l.s4 1983009808
    %v708 = vunpack.c.0.s8 %v707
    %v709 = vlaneseq
    %v710 = vshrl.u32 %v709, 7
    %v711 = vsub.s32 %v708, %v710
    %v712 = vrot.slane %v657, %v711
    %v713 = vcombine.low %v704, %v712
    %v714 = vcombine.high %v704, %v712
    %v716 = vunpack.c.l.s4 1934713408
    %v717 = vunpack.c.0.s8 %v716
    %v718 = vlaneseq
    %v719 = vshrl.u32 %v718, 7
    %v720 = vsub.s32 %v717, %v719
    %v721 = vrot.slane %v713, %v720
    %v722 = vcombine.high %v721, 0.0
    %v724 = vunpack.c.l.s4 1934713408
    %v725 = vunpack.c.0.s8 %v724
    %v726 = vlaneseq
    %v727 = vshrl.u32 %v726, 7
    %v728 = vsub.s32 %v725, %v727
    %v729 = vrot.slane %v714, %v728
    %v730 = vsel %vm442, %v688, -inf
    %731 = vmax.xlane.f32.xlu0 %v730
    %v732 = vpop.xlane.xlu0 %731
    %v733 = vsel %vm442, %v689, -inf
    %734 = vmax.xlane.f32.xlu0 %v733
    %v735 = vpop.xlane.xlu0 %734
    %v736 = vsel %vm442, %v696, -inf
    %737 = vmax.xlane.f32.xlu0 %v736
    %v738 = vpop.xlane.xlu0 %737
    %v739 = vsel %vm442, %v721, -inf
    %740 = vmax.xlane.f32.xlu0 %v739
    %v741 = vpop.xlane.xlu0 %740
    %v742 = vsel %vm442, %v722, -inf
    %743 = vmax.xlane.f32.xlu0 %v742
    %v744 = vpop.xlane.xlu0 %743
    %v745 = vsel %vm442, %v729, -inf
    %746 = vmax.xlane.f32.xlu0 %v745
    %v747 = vpop.xlane.xlu0 %746
    %v754 = vlaneseq
    %v755 = vshrl.u32 %v754, 7
    %v756 = vsub.s32 %v468, %v755
    %v757 = vrot.slane %v732, %v756
    %v758 = vlaneseq
    %v759 = vshrl.u32 %v758, 7
    %v760 = vsub.s32 %v468, %v759
    %v761 = vrot.slane %v735, %v760
    %v762 = vlaneseq
    %v763 = vshrl.u32 %v762, 7
    %v764 = vsub.s32 %v468, %v763
    %v765 = vrot.slane %v738, %v764
    %v766 = vlaneseq
    %v767 = vshrl.u32 %v766, 7
    %v768 = vsub.s32 %v468, %v767
    %v769 = vrot.slane %v741, %v768
    %v770 = vlaneseq
    %v771 = vshrl.u32 %v770, 7
    %v772 = vsub.s32 %v468, %v771
    %v773 = vrot.slane %v744, %v772
    %v774 = vlaneseq
    %v775 = vshrl.u32 %v774, 7
    %v776 = vsub.s32 %v468, %v775
    %v777 = vrot.slane %v747, %v776
    %v778 = vsel %vm335, %v761, %v757
    %v779 = vsel %vm338, %v765, %v778
    %v780 = vsel %vm335, %v773, %v769
    %v781 = vsel %vm338, %v777, %v780
    %s784 = scalar_lea.vmem %s3, 4
    %785 = vst.msk [vmem:[%s784] sm:$0x7] %vm499, %v779
    %786 = vst.msk [vmem:[%s784 + $0x10] sm:$0x7] %vm499, %v781
    %s787 = scalar_lea.vmem %s1, 32
    %vm788 = vcmask 105474
    %789 = vst.msk [vmem:[%s787 - $0x2] sm:$0xfc] %vm788, %v199
    %vm790 = vcmask 104448
    %791 = vst.msk [vmem:[%s787 + $0x6] sm:$0x7f] %vm790, %v200
    %792 = vst.msk [vmem:[%s787 + $0x3e] sm:$0xfc] %vm788, %v201
    %793 = vst.msk [vmem:[%s787 + $0x46] sm:$0x7f] %vm790, %v202
    %v794 = vmax.f32 %v199, 0.0
    %v795 = vmax.f32 %v200, 0.0
    %v796 = vmax.f32 %v201, 0.0
    %v797 = vmax.f32 %v202, 0.0
    %s798 = scalar_lea.vmem %s2, 32
    %799 = vst.msk [vmem:[%s798 - $0x2] sm:$0xfc] %vm788, %v794
    %800 = vst.msk [vmem:[%s798 + $0x6] sm:$0x7f] %vm790, %v795
    %801 = vst.msk [vmem:[%s798 + $0x3e] sm:$0xfc] %vm788, %v796
    %802 = vst.msk [vmem:[%s798 + $0x46] sm:$0x7f] %vm790, %v797
    %v807 = vcombine.high %v794, %v794
    %v808 = vcombine.high %v795, %v795
    %v809 = vcombine.high %v796, %v796
    %v810 = vcombine.high %v797, %v797
    %vm811 = vcmask 1045508
    %vm812 = vmor %vm188, %vm811
    %v813 = vrot.slane %v794, 6
    %v814 = vrot.slane %v813, 4
    %v815 = vrot.slane %v807, 6
    %v816 = vsel %vm812, %v814, %v815
    %v817 = vrot.slane %v815, 4
    %v818 = vrot.slane %v795, 6
    %v819 = vsel %vm812, %v817, %v818
    %v820 = vrot.slane %v818, 4
    %v821 = vrot.slane %v808, 6
    %v822 = vsel %vm812, %v820, %v821
    %v823 = vrot.slane %v796, 6
    %v824 = vrot.slane %v823, 4
    %v825 = vrot.slane %v809, 6
    %v826 = vsel %vm812, %v824, %v825
    %v827 = vrot.slane %v825, 4
    %v828 = vrot.slane %v797, 6
    %v829 = vsel %vm812, %v827, %v828
    %v830 = vrot.slane %v828, 4
    %v831 = vrot.slane %v810, 6
    %v832 = vsel %vm812, %v830, %v831
    %vm839 = vcmask 93184
    %v840 = vsel %vm839, %v816, -inf
    %v841 = vrot.slane %v840, 4
    %v842 = vmax.f32 %v840, %v841
    %v843 = vrot.slane %v842, 2
    %v844 = vmax.f32 %v842, %v843
    %v845 = vrot.slane %v844, 1
    %v846 = vmax.f32 %v844, %v845
    %v847 = vsel %vm839, %v819, -inf
    %v848 = vrot.slane %v847, 4
    %v849 = vmax.f32 %v847, %v848
    %v850 = vrot.slane %v849, 2
    %v851 = vmax.f32 %v849, %v850
    %v852 = vrot.slane %v851, 1
    %v853 = vmax.f32 %v851, %v852
    %v854 = vsel %vm839, %v822, -inf
    %v855 = vrot.slane %v854, 4
    %v856 = vmax.f32 %v854, %v855
    %v857 = vrot.slane %v856, 2
    %v858 = vmax.f32 %v856, %v857
    %v859 = vrot.slane %v858, 1
    %v860 = vmax.f32 %v858, %v859
    %v861 = vsel %vm839, %v826, -inf
    %v862 = vrot.slane %v861, 4
    %v863 = vmax.f32 %v861, %v862
    %v864 = vrot.slane %v863, 2
    %v865 = vmax.f32 %v863, %v864
    %v866 = vrot.slane %v865, 1
    %v867 = vmax.f32 %v865, %v866
    %v868 = vsel %vm839, %v829, -inf
    %v869 = vrot.slane %v868, 4
    %v870 = vmax.f32 %v868, %v869
    %v871 = vrot.slane %v870, 2
    %v872 = vmax.f32 %v870, %v871
    %v873 = vrot.slane %v872, 1
    %v874 = vmax.f32 %v872, %v873
    %v875 = vsel %vm839, %v832, -inf
    %v876 = vrot.slane %v875, 4
    %v877 = vmax.f32 %v875, %v876
    %v878 = vrot.slane %v877, 2
    %v879 = vmax.f32 %v877, %v878
    %v880 = vrot.slane %v879, 1
    %v881 = vmax.f32 %v879, %v880
    %888 = vrot.lane.b32.xlu0 %v846, 124
    %v889 = vpop.permute.xlu0 %888
    %890 = vrot.lane.b32.xlu0 %v853, 124
    %v891 = vpop.permute.xlu0 %890
    %892 = vrot.lane.b32.xlu0 %v860, 124
    %v893 = vpop.permute.xlu0 %892
    %894 = vrot.lane.b32.xlu0 %v867, 124
    %v895 = vpop.permute.xlu0 %894
    %896 = vrot.lane.b32.xlu0 %v874, 124
    %v897 = vpop.permute.xlu0 %896
    %898 = vrot.lane.b32.xlu0 %v881, 124
    %v899 = vpop.permute.xlu0 %898
    %900 = vrot.lane.b32.xlu0 %v846, 120
    %v901 = vpop.permute.xlu0 %900
    %902 = vrot.lane.b32.xlu0 %v853, 120
    %v903 = vpop.permute.xlu0 %902
    %904 = vrot.lane.b32.xlu0 %v860, 120
    %v905 = vpop.permute.xlu0 %904
    %906 = vrot.lane.b32.xlu0 %v867, 120
    %v907 = vpop.permute.xlu0 %906
    %908 = vrot.lane.b32.xlu0 %v874, 120
    %v909 = vpop.permute.xlu0 %908
    %910 = vrot.lane.b32.xlu0 %v881, 120
    %v911 = vpop.permute.xlu0 %910
    %v912 = vrot.slane %v853, 7
    %v913 = vsel %vm335, %v912, %v846
    %v914 = vrot.slane %v860, 6
    %v915 = vsel %vm338, %v914, %v913
    %v916 = vrot.slane %v891, 7
    %v917 = vsel %vm335, %v916, %v889
    %v918 = vrot.slane %v893, 6
    %v919 = vsel %vm338, %v918, %v917
    %v920 = vrot.slane %v903, 7
    %v921 = vsel %vm335, %v920, %v901
    %v922 = vrot.slane %v905, 6
    %v923 = vsel %vm338, %v922, %v921
    %v924 = vrot.slane %v874, 7
    %v925 = vsel %vm335, %v924, %v867
    %v926 = vrot.slane %v881, 6
    %v927 = vsel %vm338, %v926, %v925
    %v928 = vrot.slane %v897, 7
    %v929 = vsel %vm335, %v928, %v895
    %v930 = vrot.slane %v899, 6
    %v931 = vsel %vm338, %v930, %v929
    %v932 = vrot.slane %v909, 7
    %v933 = vsel %vm335, %v932, %v907
    %v934 = vrot.slane %v911, 6
    %v935 = vsel %vm338, %v934, %v933
    %v940 = vcombine.low %v915, %v923
    %v942 = vunpack.c.l.s4 1983009808
    %v943 = vunpack.c.0.s8 %v942
    %v944 = vlaneseq
    %v945 = vshrl.u32 %v944, 7
    %v946 = vsub.s32 %v943, %v945
    %v947 = vrot.slane %v940, %v946
    %v950 = vunpack.c.l.s4 1983009808
    %v951 = vunpack.c.0.s8 %v950
    %v952 = vlaneseq
    %v953 = vshrl.u32 %v952, 7
    %v954 = vsub.s32 %v951, %v953
    %v955 = vrot.slane %v919, %v954
    %v956 = vcombine.low %v947, %v955
    %v957 = vcombine.high %v947, %v955
    %v959 = vunpack.c.l.s4 1934713408
    %v960 = vunpack.c.0.s8 %v959
    %v961 = vlaneseq
    %v962 = vshrl.u32 %v961, 7
    %v963 = vsub.s32 %v960, %v962
    %v964 = vrot.slane %v956, %v963
    %v965 = vcombine.high %v964, 0.0
    %v967 = vunpack.c.l.s4 1934713408
    %v968 = vunpack.c.0.s8 %v967
    %v969 = vlaneseq
    %v970 = vshrl.u32 %v969, 7
    %v971 = vsub.s32 %v968, %v970
    %v972 = vrot.slane %v957, %v971
    %v973 = vcombine.low %v927, %v935
    %v975 = vunpack.c.l.s4 1983009808
    %v976 = vunpack.c.0.s8 %v975
    %v977 = vlaneseq
    %v978 = vshrl.u32 %v977, 7
    %v979 = vsub.s32 %v976, %v978
    %v980 = vrot.slane %v973, %v979
    %v983 = vunpack.c.l.s4 1983009808
    %v984 = vunpack.c.0.s8 %v983
    %v985 = vlaneseq
    %v986 = vshrl.u32 %v985, 7
    %v987 = vsub.s32 %v984, %v986
    %v988 = vrot.slane %v931, %v987
    %v989 = vcombine.low %v980, %v988
    %v990 = vcombine.high %v980, %v988
    %v992 = vunpack.c.l.s4 1934713408
    %v993 = vunpack.c.0.s8 %v992
    %v994 = vlaneseq
    %v995 = vshrl.u32 %v994, 7
    %v996 = vsub.s32 %v993, %v995
    %v997 = vrot.slane %v989, %v996
    %v998 = vcombine.high %v997, 0.0
    %v1000 = vunpack.c.l.s4 1934713408
    %v1001 = vunpack.c.0.s8 %v1000
    %v1002 = vlaneseq
    %v1003 = vshrl.u32 %v1002, 7
    %v1004 = vsub.s32 %v1001, %v1003
    %v1005 = vrot.slane %v990, %v1004
    %v1006 = vsel %vm442, %v964, -inf
    %1007 = vmax.xlane.f32.xlu0 %v1006
    %v1008 = vpop.xlane.xlu0 %1007
    %v1009 = vsel %vm442, %v965, -inf
    %1010 = vmax.xlane.f32.xlu0 %v1009
    %v1011 = vpop.xlane.xlu0 %1010
    %v1012 = vsel %vm442, %v972, -inf
    %1013 = vmax.xlane.f32.xlu0 %v1012
    %v1014 = vpop.xlane.xlu0 %1013
    %v1015 = vsel %vm442, %v997, -inf
    %1016 = vmax.xlane.f32.xlu0 %v1015
    %v1017 = vpop.xlane.xlu0 %1016
    %v1018 = vsel %vm442, %v998, -inf
    %1019 = vmax.xlane.f32.xlu0 %v1018
    %v1020 = vpop.xlane.xlu0 %1019
    %v1021 = vsel %vm442, %v1005, -inf
    %1022 = vmax.xlane.f32.xlu0 %v1021
    %v1023 = vpop.xlane.xlu0 %1022
    %v1030 = vlaneseq
    %v1031 = vshrl.u32 %v1030, 7
    %v1032 = vsub.s32 %v468, %v1031
    %v1033 = vrot.slane %v1008, %v1032
    %v1034 = vlaneseq
    %v1035 = vshrl.u32 %v1034, 7
    %v1036 = vsub.s32 %v468, %v1035
    %v1037 = vrot.slane %v1011, %v1036
    %v1038 = vlaneseq
    %v1039 = vshrl.u32 %v1038, 7
    %v1040 = vsub.s32 %v468, %v1039
    %v1041 = vrot.slane %v1014, %v1040
    %v1042 = vlaneseq
    %v1043 = vshrl.u32 %v1042, 7
    %v1044 = vsub.s32 %v468, %v1043
    %v1045 = vrot.slane %v1017, %v1044
    %v1046 = vlaneseq
    %v1047 = vshrl.u32 %v1046, 7
    %v1048 = vsub.s32 %v468, %v1047
    %v1049 = vrot.slane %v1020, %v1048
    %v1050 = vlaneseq
    %v1051 = vshrl.u32 %v1050, 7
    %v1052 = vsub.s32 %v468, %v1051
    %v1053 = vrot.slane %v1023, %v1052
    %v1054 = vsel %vm335, %v1037, %v1033
    %v1055 = vsel %vm338, %v1041, %v1054
    %v1056 = vsel %vm335, %v1049, %v1045
    %v1057 = vsel %vm338, %v1053, %v1056
    %s1060 = scalar_lea.vmem %s3, 8
    %1061 = vst.msk [vmem:[%s1060] sm:$0x7] %vm499, %v1055
    %1062 = vst.msk [vmem:[%s1060 + $0x10] sm:$0x7] %vm499, %v1057
    %s1063 = scalar_lea.vmem %s1, 48
    %1064 = vst.msk [vmem:[%s1063 - $0x2] sm:$0xfc] %vm788, %v207
    %1065 = vst.msk [vmem:[%s1063 + $0x6] sm:$0x7f] %vm790, %v208
    %1066 = vst.msk [vmem:[%s1063 + $0x3e] sm:$0xfc] %vm788, %v209
    %1067 = vst.msk [vmem:[%s1063 + $0x46] sm:$0x7f] %vm790, %v210
    %v1068 = vmax.f32 %v207, 0.0
    %v1069 = vmax.f32 %v208, 0.0
    %v1070 = vmax.f32 %v209, 0.0
    %v1071 = vmax.f32 %v210, 0.0
    %s1072 = scalar_lea.vmem %s2, 48
    %1073 = vst.msk [vmem:[%s1072 - $0x2] sm:$0xfc] %vm788, %v1068
    %1074 = vst.msk [vmem:[%s1072 + $0x6] sm:$0x7f] %vm790, %v1069
    %1075 = vst.msk [vmem:[%s1072 + $0x3e] sm:$0xfc] %vm788, %v1070
    %1076 = vst.msk [vmem:[%s1072 + $0x46] sm:$0x7f] %vm790, %v1071
    %v1081 = vcombine.high %v1068, %v1068
    %v1082 = vcombine.high %v1069, %v1069
    %v1083 = vcombine.high %v1070, %v1070
    %v1084 = vcombine.high %v1071, %v1071
    %v1085 = vrot.slane %v1068, 6
    %v1086 = vrot.slane %v1085, 4
    %v1087 = vrot.slane %v1081, 6
    %v1088 = vsel %vm812, %v1086, %v1087
    %v1089 = vrot.slane %v1087, 4
    %v1090 = vrot.slane %v1069, 6
    %v1091 = vsel %vm812, %v1089, %v1090
    %v1092 = vrot.slane %v1090, 4
    %v1093 = vrot.slane %v1082, 6
    %v1094 = vsel %vm812, %v1092, %v1093
    %v1095 = vrot.slane %v1070, 6
    %v1096 = vrot.slane %v1095, 4
    %v1097 = vrot.slane %v1083, 6
    %v1098 = vsel %vm812, %v1096, %v1097
    %v1099 = vrot.slane %v1097, 4
    %v1100 = vrot.slane %v1071, 6
    %v1101 = vsel %vm812, %v1099, %v1100
    %v1102 = vrot.slane %v1100, 4
    %v1103 = vrot.slane %v1084, 6
    %v1104 = vsel %vm812, %v1102, %v1103
    %v1111 = vsel %vm839, %v1088, -inf
    %v1112 = vrot.slane %v1111, 4
    %v1113 = vmax.f32 %v1111, %v1112
    %v1114 = vrot.slane %v1113, 2
    %v1115 = vmax.f32 %v1113, %v1114
    %v1116 = vrot.slane %v1115, 1
    %v1117 = vmax.f32 %v1115, %v1116
    %v1118 = vsel %vm839, %v1091, -inf
    %v1119 = vrot.slane %v1118, 4
    %v1120 = vmax.f32 %v1118, %v1119
    %v1121 = vrot.slane %v1120, 2
    %v1122 = vmax.f32 %v1120, %v1121
    %v1123 = vrot.slane %v1122, 1
    %v1124 = vmax.f32 %v1122, %v1123
    %v1125 = vsel %vm839, %v1094, -inf
    %v1126 = vrot.slane %v1125, 4
    %v1127 = vmax.f32 %v1125, %v1126
    %v1128 = vrot.slane %v1127, 2
    %v1129 = vmax.f32 %v1127, %v1128
    %v1130 = vrot.slane %v1129, 1
    %v1131 = vmax.f32 %v1129, %v1130
    %v1132 = vsel %vm839, %v1098, -inf
    %v1133 = vrot.slane %v1132, 4
    %v1134 = vmax.f32 %v1132, %v1133
    %v1135 = vrot.slane %v1134, 2
    %v1136 = vmax.f32 %v1134, %v1135
    %v1137 = vrot.slane %v1136, 1
    %v1138 = vmax.f32 %v1136, %v1137
    %v1139 = vsel %vm839, %v1101, -inf
    %v1140 = vrot.slane %v1139, 4
    %v1141 = vmax.f32 %v1139, %v1140
    %v1142 = vrot.slane %v1141, 2
    %v1143 = vmax.f32 %v1141, %v1142
    %v1144 = vrot.slane %v1143, 1
    %v1145 = vmax.f32 %v1143, %v1144
    %v1146 = vsel %vm839, %v1104, -inf
    %v1147 = vrot.slane %v1146, 4
    %v1148 = vmax.f32 %v1146, %v1147
    %v1149 = vrot.slane %v1148, 2
    %v1150 = vmax.f32 %v1148, %v1149
    %v1151 = vrot.slane %v1150, 1
    %v1152 = vmax.f32 %v1150, %v1151
    %1159 = vrot.lane.b32.xlu0 %v1117, 124
    %v1160 = vpop.permute.xlu0 %1159
    %1161 = vrot.lane.b32.xlu0 %v1124, 124
    %v1162 = vpop.permute.xlu0 %1161
    %1163 = vrot.lane.b32.xlu0 %v1131, 124
    %v1164 = vpop.permute.xlu0 %1163
    %1165 = vrot.lane.b32.xlu0 %v1138, 124
    %v1166 = vpop.permute.xlu0 %1165
    %1167 = vrot.lane.b32.xlu0 %v1145, 124
    %v1168 = vpop.permute.xlu0 %1167
    %1169 = vrot.lane.b32.xlu0 %v1152, 124
    %v1170 = vpop.permute.xlu0 %1169
    %1171 = vrot.lane.b32.xlu0 %v1117, 120
    %v1172 = vpop.permute.xlu0 %1171
    %1173 = vrot.lane.b32.xlu0 %v1124, 120
    %v1174 = vpop.permute.xlu0 %1173
    %1175 = vrot.lane.b32.xlu0 %v1131, 120
    %v1176 = vpop.permute.xlu0 %1175
    %1177 = vrot.lane.b32.xlu0 %v1138, 120
    %v1178 = vpop.permute.xlu0 %1177
    %1179 = vrot.lane.b32.xlu0 %v1145, 120
    %v1180 = vpop.permute.xlu0 %1179
    %1181 = vrot.lane.b32.xlu0 %v1152, 120
    %v1182 = vpop.permute.xlu0 %1181
    %v1183 = vrot.slane %v1124, 7
    %v1184 = vsel %vm335, %v1183, %v1117
    %v1185 = vrot.slane %v1131, 6
    %v1186 = vsel %vm338, %v1185, %v1184
    %v1187 = vrot.slane %v1162, 7
    %v1188 = vsel %vm335, %v1187, %v1160
    %v1189 = vrot.slane %v1164, 6
    %v1190 = vsel %vm338, %v1189, %v1188
    %v1191 = vrot.slane %v1174, 7
    %v1192 = vsel %vm335, %v1191, %v1172
    %v1193 = vrot.slane %v1176, 6
    %v1194 = vsel %vm338, %v1193, %v1192
    %v1195 = vrot.slane %v1145, 7
    %v1196 = vsel %vm335, %v1195, %v1138
    %v1197 = vrot.slane %v1152, 6
    %v1198 = vsel %vm338, %v1197, %v1196
    %v1199 = vrot.slane %v1168, 7
    %v1200 = vsel %vm335, %v1199, %v1166
    %v1201 = vrot.slane %v1170, 6
    %v1202 = vsel %vm338, %v1201, %v1200
    %v1203 = vrot.slane %v1180, 7
    %v1204 = vsel %vm335, %v1203, %v1178
    %v1205 = vrot.slane %v1182, 6
    %v1206 = vsel %vm338, %v1205, %v1204
    %v1211 = vcombine.low %v1186, %v1194
    %v1213 = vunpack.c.l.s4 1983009808
    %v1214 = vunpack.c.0.s8 %v1213
    %v1215 = vlaneseq
    %v1216 = vshrl.u32 %v1215, 7
    %v1217 = vsub.s32 %v1214, %v1216
    %v1218 = vrot.slane %v1211, %v1217
    %v1221 = vunpack.c.l.s4 1983009808
    %v1222 = vunpack.c.0.s8 %v1221
    %v1223 = vlaneseq
    %v1224 = vshrl.u32 %v1223, 7
    %v1225 = vsub.s32 %v1222, %v1224
    %v1226 = vrot.slane %v1190, %v1225
    %v1227 = vcombine.low %v1218, %v1226
    %v1228 = vcombine.high %v1218, %v1226
    %v1230 = vunpack.c.l.s4 1934713408
    %v1231 = vunpack.c.0.s8 %v1230
    %v1232 = vlaneseq
    %v1233 = vshrl.u32 %v1232, 7
    %v1234 = vsub.s32 %v1231, %v1233
    %v1235 = vrot.slane %v1227, %v1234
    %v1236 = vcombine.high %v1235, 0.0
    %v1238 = vunpack.c.l.s4 1934713408
    %v1239 = vunpack.c.0.s8 %v1238
    %v1240 = vlaneseq
    %v1241 = vshrl.u32 %v1240, 7
    %v1242 = vsub.s32 %v1239, %v1241
    %v1243 = vrot.slane %v1228, %v1242
    %v1244 = vcombine.low %v1198, %v1206
    %v1246 = vunpack.c.l.s4 1983009808
    %v1247 = vunpack.c.0.s8 %v1246
    %v1248 = vlaneseq
    %v1249 = vshrl.u32 %v1248, 7
    %v1250 = vsub.s32 %v1247, %v1249
    %v1251 = vrot.slane %v1244, %v1250
    %v1254 = vunpack.c.l.s4 1983009808
    %v1255 = vunpack.c.0.s8 %v1254
    %v1256 = vlaneseq
    %v1257 = vshrl.u32 %v1256, 7
    %v1258 = vsub.s32 %v1255, %v1257
    %v1259 = vrot.slane %v1202, %v1258
    %v1260 = vcombine.low %v1251, %v1259
    %v1261 = vcombine.high %v1251, %v1259
    %v1263 = vunpack.c.l.s4 1934713408
    %v1264 = vunpack.c.0.s8 %v1263
    %v1265 = vlaneseq
    %v1266 = vshrl.u32 %v1265, 7
    %v1267 = vsub.s32 %v1264, %v1266
    %v1268 = vrot.slane %v1260, %v1267
    %v1269 = vcombine.high %v1268, 0.0
    %v1271 = vunpack.c.l.s4 1934713408
    %v1272 = vunpack.c.0.s8 %v1271
    %v1273 = vlaneseq
    %v1274 = vshrl.u32 %v1273, 7
    %v1275 = vsub.s32 %v1272, %v1274
    %v1276 = vrot.slane %v1261, %v1275
    %v1277 = vsel %vm442, %v1235, -inf
    %1278 = vmax.xlane.f32.xlu0 %v1277
    %v1279 = vpop.xlane.xlu0 %1278
    %v1280 = vsel %vm442, %v1236, -inf
    %1281 = vmax.xlane.f32.xlu0 %v1280
    %v1282 = vpop.xlane.xlu0 %1281
    %v1283 = vsel %vm442, %v1243, -inf
    %1284 = vmax.xlane.f32.xlu0 %v1283
    %v1285 = vpop.xlane.xlu0 %1284
    %v1286 = vsel %vm442, %v1268, -inf
    %1287 = vmax.xlane.f32.xlu0 %v1286
    %v1288 = vpop.xlane.xlu0 %1287
    %v1289 = vsel %vm442, %v1269, -inf
    %1290 = vmax.xlane.f32.xlu0 %v1289
    %v1291 = vpop.xlane.xlu0 %1290
    %v1292 = vsel %vm442, %v1276, -inf
    %1293 = vmax.xlane.f32.xlu0 %v1292
    %v1294 = vpop.xlane.xlu0 %1293
    %v1301 = vlaneseq
    %v1302 = vshrl.u32 %v1301, 7
    %v1303 = vsub.s32 %v468, %v1302
    %v1304 = vrot.slane %v1279, %v1303
    %v1305 = vlaneseq
    %v1306 = vshrl.u32 %v1305, 7
    %v1307 = vsub.s32 %v468, %v1306
    %v1308 = vrot.slane %v1282, %v1307
    %v1309 = vlaneseq
    %v1310 = vshrl.u32 %v1309, 7
    %v1311 = vsub.s32 %v468, %v1310
    %v1312 = vrot.slane %v1285, %v1311
    %v1313 = vlaneseq
    %v1314 = vshrl.u32 %v1313, 7
    %v1315 = vsub.s32 %v468, %v1314
    %v1316 = vrot.slane %v1288, %v1315
    %v1317 = vlaneseq
    %v1318 = vshrl.u32 %v1317, 7
    %v1319 = vsub.s32 %v468, %v1318
    %v1320 = vrot.slane %v1291, %v1319
    %v1321 = vlaneseq
    %v1322 = vshrl.u32 %v1321, 7
    %v1323 = vsub.s32 %v468, %v1322
    %v1324 = vrot.slane %v1294, %v1323
    %v1325 = vsel %vm335, %v1308, %v1304
    %v1326 = vsel %vm338, %v1312, %v1325
    %v1327 = vsel %vm335, %v1320, %v1316
    %v1328 = vsel %vm338, %v1324, %v1327
    %s1331 = scalar_lea.vmem %s3, 12
    %1332 = vst.msk [vmem:[%s1331] sm:$0x7] %vm499, %v1326
    %1333 = vst.msk [vmem:[%s1331 + $0x10] sm:$0x7] %vm499, %v1328
    // Predicated region
    $region10: #{tpu_custom_call.1} parent=1 // pred_check
      _
    $region11: #{tpu_custom_call.1} parent=1 // pred_check_branch
      %1335 = sbr.rel (0) target = $region13
    $region12: #{tpu_custom_call.1} parent=1 // pred_region
      _
    $region13: #{tpu_custom_call.1} parent=1 // pred_fallthru
      _
    // Predicated region
    $region14: #{tpu_custom_call.1} parent=1 // pred_check
      _
    $region15: #{tpu_custom_call.1} parent=1 // pred_check_branch
      %1337 = sbr.rel (0) target = $region17
    $region16: #{tpu_custom_call.1} parent=1 // pred_region
      _
    $region17: #{tpu_custom_call.1} parent=1 // pred_fallthru
      _
    // Predicated region
    $region18: #{tpu_custom_call.1} parent=1 // pred_check
      _
    $region19: #{tpu_custom_call.1} parent=1 // pred_check_branch
      %1339 = sbr.rel (0) target = $region21
    $region20: #{tpu_custom_call.1} parent=1 // pred_region
      _
    $region21: #{tpu_custom_call.1} parent=1 // pred_fallthru
      _
    // Predicated region
    $region22: #{tpu_custom_call.1} parent=1 // pred_check
      _
    $region23: #{tpu_custom_call.1} parent=1 // pred_check_branch
      %1341 = sbr.rel (0) target = $region25
    $region24: #{tpu_custom_call.1} parent=1 // pred_region
      _
    $region25: #{tpu_custom_call.1} parent=1 // pred_fallthru
      _
    // Predicated region
    $region26: #{tpu_custom_call.1} parent=1 // pred_check
      _
    $region27: #{tpu_custom_call.1} parent=1 // pred_check_branch
      %1343 = sbr.rel (0) target = $region29
    $region28: #{tpu_custom_call.1} parent=1 // pred_region
      _
    $region29: #{tpu_custom_call.1} parent=1 // pred_fallthru
      _
    // Predicated region
    $region30: #{tpu_custom_call.1} parent=1 // pred_check
      _
    $region31: #{tpu_custom_call.1} parent=1 // pred_check_branch
      %1345 = sbr.rel (0) target = $region33
    $region32: #{tpu_custom_call.1} parent=1 // pred_region
      _
    $region33: #{tpu_custom_call.1} parent=1 // pred_fallthru
      _
    %1346 = vsyncpa [#allocation3], 1

</llo_original>
